<compile_context>
chip_gen: v7x
topology: tpu7x:2x2x1
jax: 0.10.0
libtpu: 0.0.40
codegen_flags: <defaults>
</compile_context>

<pallas_src>
import jax
import jax.numpy as jnp
from jax import lax
from jax.experimental import pallas as pl
from jax.experimental.pallas import tpu as pltpu


_EPS = 1e-12  # matches torch.nn.functional.normalize default eps


def _round_up(x, m):
    return ((x + m - 1) // m) * m


# --------------------------------------------------------------------------
# Pass 1 (O(N*H)): U = l2_normalize(emb),  V = U * (d * scale)
# --------------------------------------------------------------------------
def _prep_kernel(emb_ref, ds_ref, u_ref, v_ref):
    """emb_ref: (tr, H)  ds_ref: (1, H) f32  u_ref/v_ref: (tr, H)."""
    x = emb_ref[...].astype(jnp.float32)
    sumsq = jnp.sum(x * x, axis=-1, keepdims=True)           # XLU lane reduce
    inv = lax.rsqrt(jnp.maximum(sumsq, _EPS * _EPS))          # EUP, no VPU divide
    u = x * inv                                               # broadcast mul
    u_ref[...] = u.astype(u_ref.dtype)
    v_ref[...] = (u * ds_ref[...]).astype(v_ref.dtype)        # d*scale folded in


# --------------------------------------------------------------------------
# Pass 2 (O(N^2*H)): one (tm, tn) tile of  U @ V.T   (scale already in V)
# --------------------------------------------------------------------------
def _pair_kernel(u_ref, v_ref, o_ref):
    o_ref[...] = lax.dot_general(
        u_ref[...], v_ref[...],
        dimension_numbers=(((1,), (1,)), ((), ())),           # U @ V.T, no XLU
        preferred_element_type=jnp.float32,
    ).astype(o_ref.dtype)


def local_emb_d_forward(emb, d, scale, *, block_m=512, block_n=512,
                        vmem_budget=40 << 20):
    """emb: [N, H]; d: [H]; scale: scalar (or [1]). Returns pair_dis: [N*N]."""
    N, H = emb.shape
    in_dt = emb.dtype
    in_item = jnp.dtype(in_dt).itemsize
    out_item = in_item

    # ----- tile selection: fixed lane-dense tiles, no divisor search -------
    tm = block_m if N > block_m else _round_up(N, 8)       # sublane axis: x8
    tn = block_n if N > block_n else _round_up(N, 128)     # lane axis: x128

    def vmem_bytes(tm_, tn_):
        # double-buffered U / V operand blocks + double-buffered output tile
        return 2 * (tm_ + tn_) * H * in_item + 2 * tm_ * tn_ * out_item

    # Shrink tm first (any x8 streams fine), keep tn >= 256 for the 256x256 MXU.
    while vmem_bytes(tm, tn) > vmem_budget and tm > 64:
        tm = _round_up(max(64, tm // 2), 8)
    while vmem_bytes(tm, tn) > vmem_budget and tn > 256:
        tn = _round_up(max(256, tn // 2), 128)

    grid_m = pl.cdiv(N, tm)
    grid_n = pl.cdiv(N, tn)
    np_m = grid_m * tm
    np_n = grid_n * tn

    # Row padding so every block (prep and matmul) is full -- padded rows are
    # all-zero, normalize to exactly 0, and are sliced off at the end.
    np0 = max(np_m, np_n)
    tr = min(256, np0)                       # prep row tile (multiple of 8)
    np_rows = _round_up(np0, tr)

    emb_p = emb
    if np_rows != N:
        emb_p = jnp.zeros((np_rows, H), in_dt).at[:N, :].set(emb)

    # Fold the learned scalar into the per-feature scale (O(H) on host/XLA).
    ds = (d.astype(jnp.float32) *
          jnp.asarray(scale, jnp.float32).reshape(())).reshape(1, H)

    # ----- pass 1: normalize + column-scale once ----------------------------
    u_arr, v_arr = pl.pallas_call(
        _prep_kernel,
        out_shape=(jax.ShapeDtypeStruct((np_rows, H), in_dt),
                   jax.ShapeDtypeStruct((np_rows, H), in_dt)),
        grid=(np_rows // tr,),
        in_specs=[pl.BlockSpec((tr, H), lambda i: (i, 0)),
                  pl.BlockSpec((1, H), lambda i: (0, 0))],     # ds resident
        out_specs=(pl.BlockSpec((tr, H), lambda i: (i, 0)),
                   pl.BlockSpec((tr, H), lambda i: (i, 0))),
        compiler_params=pltpu.CompilerParams(
            dimension_semantics=("parallel",)),
    )(emb_p, ds)

    # ----- pass 2: pairwise matmul ------------------------------------------
    cost = pl.CostEstimate(
        flops=2 * np_m * np_n * H,
        transcendentals=0,
        # u blocks streamed once per i-row; v blocks re-streamed per i-row.
        bytes_accessed=(np_m * H + grid_m * np_n * H) * in_item
        + np_m * np_n * out_item,
    )
    out = pl.pallas_call(
        _pair_kernel,
        out_shape=jax.ShapeDtypeStruct((np_m, np_n), in_dt),
        grid=(grid_m, grid_n),                 # j innermost -> u block reused
        in_specs=[pl.BlockSpec((tm, H), lambda i, j: (i, 0)),
                  pl.BlockSpec((tn, H), lambda i, j: (j, 0))],
        out_specs=pl.BlockSpec((tm, tn), lambda i, j: (i, j)),
        compiler_params=pltpu.CompilerParams(
            dimension_semantics=("parallel", "parallel"),      # v7x: 2 TCs
            vmem_limit_bytes=int(max(
                32 << 20, min(48 << 20, vmem_bytes(tm, tn) + (8 << 20))))),
        cost_estimate=cost,
    )(u_arr, v_arr)

    if np_m != N or np_n != N:
        out = out[:N, :N]
    # PyTorch's .view(-1): row-major flatten (free reshape).
    return out.reshape(-1)


def reference_forward(emb, d, scale):
    norm = jnp.sqrt(jnp.sum(emb * emb, axis=-1, keepdims=True))
    embn = emb / jnp.maximum(norm, _EPS)
    v = embn * d[None, :]
    return (embn @ v.T).reshape(-1) * scale


if __name__ == "__main__":
    n_hidden = 32
    n_samples = 8

    key = jax.random.PRNGKey(0)
    k_emb, k_d = jax.random.split(key)
    emb = jax.random.normal(k_emb, (n_samples, n_hidden), jnp.float32)

    # Parameters (torch init is d = ones, scale = 0.5; use a non-trivial d so
    # the check exercises the diag(d) path).
    d = 1.0 + 0.1 * jax.random.normal(k_d, (n_hidden,), jnp.float32)
    scale = jnp.float32(0.5)

    pair_dis = local_emb_d_forward(emb, d, scale)
    pair_dis = jax.block_until_ready(pair_dis)

    ref = reference_forward(emb, d, scale)
    assert pair_dis.shape == (n_samples * n_samples,)
    assert jnp.allclose(pair_dis, ref, atol=1e-5, rtol=1e-5)

    print("KERNEL_OK")
</pallas_src>

<mosaic_0001>
module attributes {stable_mosaic.version = 11 : i64} {
  func.func @_prep_kernel(%arg0: i32, %arg1: memref<128x32xf32, #tpu.memory_space<vmem>>, %arg2: memref<1x32xf32, #tpu.memory_space<vmem>>, %arg3: memref<128x32xf32, #tpu.memory_space<vmem>>, %arg4: memref<128x32xf32, #tpu.memory_space<vmem>>) attributes {dimension_semantics = [#tpu.dimension_semantics<parallel>], iteration_bounds = array<i64: 1>, scalar_prefetch = 0 : i64, scratch_operands = 0 : i64, tpu.core_type = #tpu.core_type<tc>, window_params = [{transform_indices = @transform_0, window_bounds = array<i64: 128, 32>}, {pipeline_mode = #tpu.pipeline_mode<synchronous>, transform_indices = @transform_1, window_bounds = array<i64: 1, 32>}, {transform_indices = @transform_2, window_bounds = array<i64: 128, 32>}, {transform_indices = @transform_3, window_bounds = array<i64: 128, 32>}]} {
    %c0 = arith.constant 0 : index
    %c0_0 = arith.constant 0 : index
    %0 = vector.load %arg1[%c0, %c0_0] : memref<128x32xf32, #tpu.memory_space<vmem>>, vector<128x32xf32>
    %1 = arith.mulf %0, %0 : vector<128x32xf32>
    %cst = arith.constant dense<0.000000e+00> : vector<128xf32>
    %2 = vector.multi_reduction <add>, %1, %cst [1] : vector<128x32xf32> to vector<128xf32>
    %3 = vector.shape_cast %2 : vector<128xf32> to vector<128x1xf32>
    %cst_1 = arith.constant 1.000000e-24 : f32
    %4 = vector.broadcast %cst_1 : f32 to vector<128x1xf32>
    %5 = arith.maximumf %3, %4 : vector<128x1xf32>
    %6 = math.rsqrt %5 : vector<128x1xf32>
    %7 = vector.broadcast %6 : vector<128x1xf32> to vector<128x32xf32>
    %8 = arith.mulf %0, %7 : vector<128x32xf32>
    %c0_2 = arith.constant 0 : index
    %c0_3 = arith.constant 0 : index
    %9 = vector.load %arg3[%c0_2, %c0_3] : memref<128x32xf32, #tpu.memory_space<vmem>>, vector<128x32xf32>
    tpu.vector_store %arg3[%c0_2, %c0_3], %8 {strides = array<i32>} : memref<128x32xf32, #tpu.memory_space<vmem>>, vector<128x32xf32>,
    %c0_4 = arith.constant 0 : index
    %c0_5 = arith.constant 0 : index
    %10 = vector.load %arg2[%c0_4, %c0_5] : memref<1x32xf32, #tpu.memory_space<vmem>>, vector<1x32xf32>
    %11 = vector.broadcast %10 : vector<1x32xf32> to vector<128x32xf32>
    %12 = arith.mulf %8, %11 : vector<128x32xf32>
    %c0_6 = arith.constant 0 : index
    %c0_7 = arith.constant 0 : index
    %13 = vector.load %arg4[%c0_6, %c0_7] : memref<128x32xf32, #tpu.memory_space<vmem>>, vector<128x32xf32>
    tpu.vector_store %arg4[%c0_6, %c0_7], %12 {strides = array<i32>} : memref<128x32xf32, #tpu.memory_space<vmem>>, vector<128x32xf32>,
    return
  }
  func.func @transform_0(%arg0: i32) -> (i32, i32) {
    %c0_i32 = arith.constant 0 : i32
    %c0_i32_0 = arith.constant 0 : i32
    return %arg0, %c0_i32 : i32, i32
  }
  func.func @transform_1(%arg0: i32) -> (i32, i32) {
    %c0_i32 = arith.constant 0 : i32
    %c0_i32_0 = arith.constant 0 : i32
    %c0_i32_1 = arith.constant 0 : i32
    return %c0_i32, %c0_i32_0 : i32, i32
  }
  func.func @transform_2(%arg0: i32) -> (i32, i32) {
    %c0_i32 = arith.constant 0 : i32
    %c0_i32_0 = arith.constant 0 : i32
    return %arg0, %c0_i32 : i32, i32
  }
  func.func @transform_3(%arg0: i32) -> (i32, i32) {
    %c0_i32 = arith.constant 0 : i32
    %c0_i32_0 = arith.constant 0 : i32
    return %arg0, %c0_i32 : i32, i32
  }
}

</mosaic_0001>

<llo_original>
// kernel: tpu_custom_call.1
$region0: #{tpu_custom_call.1}
  #allocation0 [shape = 'u32[]', space=smem, size = 0x4, offset = 0x4, fixed_abs, tag = 'smem constant byte address 0x4 - core index']
  #allocation1 [shape = 'u32[144,128]{1,0:T(1,128)}', space=vmem, size = 0x12000, scoped, tag = 'internal scratch']
  %s0 = inlined_call_operand.vmem [shape: f32[128,32], index: 0, kind: input, shape index: {}]
  %s1 = inlined_call_operand.vmem [shape: f32[1,32], index: 1, kind: input, shape index: {}]
  %s2 = inlined_call_operand.vmem [shape: f32[128,32], index: 2, kind: output, shape index: {0}]
  %s3 = inlined_call_operand.vmem [shape: f32[128,32], index: 3, kind: output, shape index: {1}]
  %4 = xla_tuple %s2, %s3
  %s5 = sld [smem:[#allocation0]]
  $region26: #{tpu_custom_call.1} parent=0
    _
  %s7 = ssub.s32 1, %s5
  %s8 = scalar_select 0, %s7, %s5
  // Predicated region
  $region2: #{tpu_custom_call.1} parent=0 // pred_check
    _
  $region3: #{tpu_custom_call.1} parent=0 // pred_check_branch
    %10 = sbr.rel (0) target = $region5
  $region4: #{tpu_custom_call.1} parent=0 // pred_region
    _
  $region5: #{tpu_custom_call.1} parent=0 // pred_fallthru
    _
  // Predicated region
  $region6: #{tpu_custom_call.1} parent=0 // pred_check
    _
  $region7: #{tpu_custom_call.1} parent=0 // pred_check_branch
    %12 = sbr.rel (0) target = $region9
  $region8: #{tpu_custom_call.1} parent=0 // pred_region
    _
  $region9: #{tpu_custom_call.1} parent=0 // pred_fallthru
    _
  %v13 = vld [vmem:[%s0] sm:$0xff]
  %v14 = vld [vmem:[%s0 + $0x8] sm:$0xff]
  %v15 = vld [vmem:[%s0 + $0x10] sm:$0xff]
  %v16 = vld [vmem:[%s0 + $0x18] sm:$0xff]
  %v17 = vld [vmem:[%s0 + $0x20] sm:$0xff]
  %v18 = vld [vmem:[%s0 + $0x28] sm:$0xff]
  %v19 = vld [vmem:[%s0 + $0x30] sm:$0xff]
  %v20 = vld [vmem:[%s0 + $0x38] sm:$0xff]
  %v21 = vld [vmem:[%s0 + $0x40] sm:$0xff]
  %v22 = vld [vmem:[%s0 + $0x48] sm:$0xff]
  %v23 = vld [vmem:[%s0 + $0x50] sm:$0xff]
  %v24 = vld [vmem:[%s0 + $0x58] sm:$0xff]
  %v25 = vld [vmem:[%s0 + $0x60] sm:$0xff]
  %v26 = vld [vmem:[%s0 + $0x68] sm:$0xff]
  %v27 = vld [vmem:[%s0 + $0x70] sm:$0xff]
  %v28 = vld [vmem:[%s0 + $0x78] sm:$0xff]
  %v29 = vmul.f32 %v13, %v13
  %v30 = vmul.f32 %v14, %v14
  %v31 = vmul.f32 %v15, %v15
  %v32 = vmul.f32 %v16, %v16
  %v33 = vmul.f32 %v17, %v17
  %v34 = vmul.f32 %v18, %v18
  %v35 = vmul.f32 %v19, %v19
  %v36 = vmul.f32 %v20, %v20
  %v37 = vmul.f32 %v21, %v21
  %v38 = vmul.f32 %v22, %v22
  %v39 = vmul.f32 %v23, %v23
  %v40 = vmul.f32 %v24, %v24
  %v41 = vmul.f32 %v25, %v25
  %v42 = vmul.f32 %v26, %v26
  %v43 = vmul.f32 %v27, %v27
  %v44 = vmul.f32 %v28, %v28
  %vm45 = vcmask 261120
  %v46 = vsel %vm45, %v29, 0.0
  %47 = vadd.xlane.f32.xlu0 %v46
  %v48 = vpop.xlane.xlu0 %47
  %v49 = vsel %vm45, %v30, 0.0
  %50 = vadd.xlane.f32.xlu0 %v49
  %v51 = vpop.xlane.xlu0 %50
  %v52 = vsel %vm45, %v31, 0.0
  %53 = vadd.xlane.f32.xlu0 %v52
  %v54 = vpop.xlane.xlu0 %53
  %v55 = vsel %vm45, %v32, 0.0
  %56 = vadd.xlane.f32.xlu0 %v55
  %v57 = vpop.xlane.xlu0 %56
  %v58 = vsel %vm45, %v33, 0.0
  %59 = vadd.xlane.f32.xlu0 %v58
  %v60 = vpop.xlane.xlu0 %59
  %v61 = vsel %vm45, %v34, 0.0
  %62 = vadd.xlane.f32.xlu0 %v61
  %v63 = vpop.xlane.xlu0 %62
  %v64 = vsel %vm45, %v35, 0.0
  %65 = vadd.xlane.f32.xlu0 %v64
  %v66 = vpop.xlane.xlu0 %65
  %v67 = vsel %vm45, %v36, 0.0
  %68 = vadd.xlane.f32.xlu0 %v67
  %v69 = vpop.xlane.xlu0 %68
  %v70 = vsel %vm45, %v37, 0.0
  %71 = vadd.xlane.f32.xlu0 %v70
  %v72 = vpop.xlane.xlu0 %71
  %v73 = vsel %vm45, %v38, 0.0
  %74 = vadd.xlane.f32.xlu0 %v73
  %v75 = vpop.xlane.xlu0 %74
  %v76 = vsel %vm45, %v39, 0.0
  %77 = vadd.xlane.f32.xlu0 %v76
  %v78 = vpop.xlane.xlu0 %77
  %v79 = vsel %vm45, %v40, 0.0
  %80 = vadd.xlane.f32.xlu0 %v79
  %v81 = vpop.xlane.xlu0 %80
  %v82 = vsel %vm45, %v41, 0.0
  %83 = vadd.xlane.f32.xlu0 %v82
  %v84 = vpop.xlane.xlu0 %83
  %v85 = vsel %vm45, %v42, 0.0
  %86 = vadd.xlane.f32.xlu0 %v85
  %v87 = vpop.xlane.xlu0 %86
  %v88 = vsel %vm45, %v43, 0.0
  %89 = vadd.xlane.f32.xlu0 %v88
  %v90 = vpop.xlane.xlu0 %89
  %v91 = vsel %vm45, %v44, 0.0
  %92 = vadd.xlane.f32.xlu0 %v91
  %v93 = vpop.xlane.xlu0 %92
  %v94 = vmax.f32 %v48, 1e-24
  %v95 = vmax.f32 %v51, 1e-24
  %v96 = vmax.f32 %v54, 1e-24
  %v97 = vmax.f32 %v57, 1e-24
  %v98 = vmax.f32 %v60, 1e-24
  %v99 = vmax.f32 %v63, 1e-24
  %v100 = vmax.f32 %v66, 1e-24
  %v101 = vmax.f32 %v69, 1e-24
  %v102 = vmax.f32 %v72, 1e-24
  %v103 = vmax.f32 %v75, 1e-24
  %v104 = vmax.f32 %v78, 1e-24
  %v105 = vmax.f32 %v81, 1e-24
  %v106 = vmax.f32 %v84, 1e-24
  %v107 = vmax.f32 %v87, 1e-24
  %v108 = vmax.f32 %v90, 1e-24
  %v109 = vmax.f32 %v93, 1e-24
  %v110 = vrsqrt.pop %v94
  %v111 = vrsqrt.pop %v95
  %v112 = vrsqrt.pop %v96
  %v113 = vrsqrt.pop %v97
  %v114 = vrsqrt.pop %v98
  %v115 = vrsqrt.pop %v99
  %v116 = vrsqrt.pop %v100
  %v117 = vrsqrt.pop %v101
  %v118 = vrsqrt.pop %v102
  %v119 = vrsqrt.pop %v103
  %v120 = vrsqrt.pop %v104
  %v121 = vrsqrt.pop %v105
  %v122 = vrsqrt.pop %v106
  %v123 = vrsqrt.pop %v107
  %v124 = vrsqrt.pop %v108
  %v125 = vrsqrt.pop %v109
  %v126 = vmul.f32 %v13, %v110
  %v127 = vmul.f32 %v14, %v111
  %v128 = vmul.f32 %v15, %v112
  %v129 = vmul.f32 %v16, %v113
  %v130 = vmul.f32 %v17, %v114
  %v131 = vmul.f32 %v18, %v115
  %v132 = vmul.f32 %v19, %v116
  %v133 = vmul.f32 %v20, %v117
  %v134 = vmul.f32 %v21, %v118
  %v135 = vmul.f32 %v22, %v119
  %v136 = vmul.f32 %v23, %v120
  %v137 = vmul.f32 %v24, %v121
  %v138 = vmul.f32 %v25, %v122
  %v139 = vmul.f32 %v26, %v123
  %v140 = vmul.f32 %v27, %v124
  %v141 = vmul.f32 %v28, %v125
  %142 = vst.msk [vmem:[%s2] sm:$0xff] %vm45, %v126
  %143 = vst.msk [vmem:[%s2 + $0x8] sm:$0xff] %vm45, %v127
  %144 = vst.msk [vmem:[%s2 + $0x10] sm:$0xff] %vm45, %v128
  %145 = vst.msk [vmem:[%s2 + $0x18] sm:$0xff] %vm45, %v129
  %146 = vst.msk [vmem:[%s2 + $0x20] sm:$0xff] %vm45, %v130
  %147 = vst.msk [vmem:[%s2 + $0x28] sm:$0xff] %vm45, %v131
  %148 = vst.msk [vmem:[%s2 + $0x30] sm:$0xff] %vm45, %v132
  %149 = vst.msk [vmem:[%s2 + $0x38] sm:$0xff] %vm45, %v133
  %150 = vst.msk [vmem:[%s2 + $0x40] sm:$0xff] %vm45, %v134
  %151 = vst.msk [vmem:[%s2 + $0x48] sm:$0xff] %vm45, %v135
  %152 = vst.msk [vmem:[%s2 + $0x50] sm:$0xff] %vm45, %v136
  %153 = vst.msk [vmem:[%s2 + $0x58] sm:$0xff] %vm45, %v137
  %154 = vst.msk [vmem:[%s2 + $0x60] sm:$0xff] %vm45, %v138
  %155 = vst.msk [vmem:[%s2 + $0x68] sm:$0xff] %vm45, %v139
  %156 = vst.msk [vmem:[%s2 + $0x70] sm:$0xff] %vm45, %v140
  %157 = vst.msk [vmem:[%s2 + $0x78] sm:$0xff] %vm45, %v141
  %v158 = vld [vmem:[%s1] sm:$0x1]
  %v160 = vlaneseq
  %v161 = vshrl.u32 %v160, 7
  %v162 = vsub.s32 0, %v161
  %v163 = vrot.slane %v158, %v162
  %v165 = vmul.f32 %v126, %v163
  %v166 = vmul.f32 %v127, %v163
  %v167 = vmul.f32 %v128, %v163
  %v168 = vmul.f32 %v129, %v163
  %v169 = vmul.f32 %v130, %v163
  %v170 = vmul.f32 %v131, %v163
  %v171 = vmul.f32 %v132, %v163
  %v172 = vmul.f32 %v133, %v163
  %v173 = vmul.f32 %v134, %v163
  %v174 = vmul.f32 %v135, %v163
  %v175 = vmul.f32 %v136, %v163
  %v176 = vmul.f32 %v137, %v163
  %v177 = vmul.f32 %v138, %v163
  %v178 = vmul.f32 %v139, %v163
  %v179 = vmul.f32 %v140, %v163
  %v180 = vmul.f32 %v141, %v163
  %181 = vst.msk [vmem:[%s3] sm:$0xff] %vm45, %v165
  %182 = vst.msk [vmem:[%s3 + $0x8] sm:$0xff] %vm45, %v166
  %183 = vst.msk [vmem:[%s3 + $0x10] sm:$0xff] %vm45, %v167
  %184 = vst.msk [vmem:[%s3 + $0x18] sm:$0xff] %vm45, %v168
  %185 = vst.msk [vmem:[%s3 + $0x20] sm:$0xff] %vm45, %v169
  %186 = vst.msk [vmem:[%s3 + $0x28] sm:$0xff] %vm45, %v170
  %187 = vst.msk [vmem:[%s3 + $0x30] sm:$0xff] %vm45, %v171
  %188 = vst.msk [vmem:[%s3 + $0x38] sm:$0xff] %vm45, %v172
  %189 = vst.msk [vmem:[%s3 + $0x40] sm:$0xff] %vm45, %v173
  %190 = vst.msk [vmem:[%s3 + $0x48] sm:$0xff] %vm45, %v174
  %191 = vst.msk [vmem:[%s3 + $0x50] sm:$0xff] %vm45, %v175
  %192 = vst.msk [vmem:[%s3 + $0x58] sm:$0xff] %vm45, %v176
  %193 = vst.msk [vmem:[%s3 + $0x60] sm:$0xff] %vm45, %v177
  %194 = vst.msk [vmem:[%s3 + $0x68] sm:$0xff] %vm45, %v178
  %195 = vst.msk [vmem:[%s3 + $0x70] sm:$0xff] %vm45, %v179
  %196 = vst.msk [vmem:[%s3 + $0x78] sm:$0xff] %vm45, %v180
  // Predicated region
  $region10: #{tpu_custom_call.1} parent=0 // pred_check
    _
  $region11: #{tpu_custom_call.1} parent=0 // pred_check_branch
    %198 = sbr.rel (0) target = $region13
  $region12: #{tpu_custom_call.1} parent=0 // pred_region
    _
  $region13: #{tpu_custom_call.1} parent=0 // pred_fallthru
    _
  // Predicated region
  $region14: #{tpu_custom_call.1} parent=0 // pred_check
    _
  $region15: #{tpu_custom_call.1} parent=0 // pred_check_branch
    %200 = sbr.rel (0) target = $region17
  $region16: #{tpu_custom_call.1} parent=0 // pred_region
    _
  $region17: #{tpu_custom_call.1} parent=0 // pred_fallthru
    _
  // Predicated region
  $region18: #{tpu_custom_call.1} parent=0 // pred_check
    _
  $region19: #{tpu_custom_call.1} parent=0 // pred_check_branch
    %202 = sbr.rel (0) target = $region21
  $region20: #{tpu_custom_call.1} parent=0 // pred_region
    _
  $region21: #{tpu_custom_call.1} parent=0 // pred_fallthru
    _
  // Predicated region
  $region22: #{tpu_custom_call.1} parent=0 // pred_check
    _
  $region23: #{tpu_custom_call.1} parent=0 // pred_check_branch
    %204 = sbr.rel (0) target = $region25
  $region24: #{tpu_custom_call.1} parent=0 // pred_region
    _
  $region25: #{tpu_custom_call.1} parent=0 // pred_fallthru
    _

</llo_original>
